<compile_context>
chip_gen: v6e
topology: v6e:2x2x1
jax: 0.10.0
libtpu: 0.0.40
codegen_flags: <defaults>
</compile_context>

<pallas_src>
import numpy as np
import jax
import jax.numpy as jnp
from jax.experimental import pallas as pl
from jax.experimental.pallas import tpu as pltpu


# ----------------------------------------------------------------------------
# Host-side (glue): linear operators for AdaptiveAvgPool2d and
# F.interpolate(mode='bilinear', align_corners=False)  (PyTorch defaults).
# ----------------------------------------------------------------------------
def adaptive_pool_matrix(in_size: int, out_size: int) -> np.ndarray:
    """P[i, h] s.t. pooled[i] = sum_h P[i, h] * x[h] (PyTorch AdaptiveAvgPool bins)."""
    P = np.zeros((out_size, in_size), np.float32)
    for i in range(out_size):
        start = (i * in_size) // out_size
        end = -((-(i + 1) * in_size) // out_size)      # ceil((i+1)*in/out)
        P[i, start:end] = 1.0 / float(end - start)
    return P


def bilinear_upsample_matrix(out_size: int, in_size: int) -> np.ndarray:
    """U[o, i] for F.interpolate bilinear, align_corners=False."""
    U = np.zeros((out_size, in_size), np.float32)
    scale = in_size / out_size
    for o in range(out_size):
        src = max(scale * (o + 0.5) - 0.5, 0.0)
        i0 = min(int(np.floor(src)), in_size - 1)
        i1 = min(i0 + 1, in_size - 1)
        w1 = src - i0
        U[o, i0] += 1.0 - w1
        U[o, i1] += w1
    return U


# ----------------------------------------------------------------------------
# Pallas kernel (one grid step = NB batch elements).
# ----------------------------------------------------------------------------
def _make_psp_kernel(nb, c, s, hw):
    """nb: batch elems per grid step; c: channels; s: #pyramid stages; hw: H*W."""

    def kernel(x_ref, kt_ref, wf_ref, bb_ref, o_ref, cat_ref):
        # x_ref  : (nb*c, hw)         bf16  rows = nb batch elems x c channels
        # kt_ref : (hw, s*hw)         bf16  stacked (pool+bilinear)^T, one per stage
        # wf_ref : (OutC, (s+1)*c)    f32   bottleneck weight w/ stage convs folded in
        # bb_ref : (OutC, 1)          f32   bottleneck bias
        # o_ref  : (OutC, nb*hw)      f32   output slab (batch on the lane axis)
        # cat_ref: ((s+1)*c, nb*hw)   f32   VMEM scratch == the "torch.cat" buffer
        x = x_ref[...]

        # One wide spatial matmul: all pyramid stages, all nb batch elements.
        t = jnp.dot(x, kt_ref[...], preferred_element_type=jnp.float32)  # (nb*c, s*hw)

        # Relayout (batch,channel) x (stage,pixel) -> (stage,channel) x (batch,pixel).
        # Every row of cat_ref is rewritten each grid step (no stale/NaN reads).
        for b in range(nb):
            col = b * hw
            rows = slice(b * c, (b + 1) * c)
            for g in range(s):
                cat_ref[g * c:(g + 1) * c, col:col + hw] = \
                    t[rows, g * hw:(g + 1) * hw]
            cat_ref[s * c:(s + 1) * c, col:col + hw] = x[rows, :].astype(jnp.float32)

        # Single bottleneck matmul (== torch.cat + 1x1 conv), bias add, ReLU.
        out = jnp.dot(wf_ref[...], cat_ref[...], preferred_element_type=jnp.float32)
        out = out + bb_ref[...]                  # broadcast (OutC,1) -> (OutC, nb*hw)
        o_ref[...] = jnp.maximum(out, 0.0).astype(o_ref.dtype)

    return kernel


def _pick_block_batch(N, C, HW):
    """Batch elements per grid step: prefer full 8-row sublane groups for the
    MXU, then >=2 grid steps (so megacore chips get work), subject to
    BlockSpec tiling legality for the bf16 input / f32 output blocks."""
    best, best_key = N, None
    for nb in range(1, N + 1):
        if N % nb:
            continue
        full = nb == N
        legal = full or ((nb * C) % 16 == 0 and (nb * HW) % 128 == 0)
        if not legal:
            continue
        key = ((nb * C) % 8 == 0,     # fills MXU sublane groups
               (N // nb) >= 2,        # >=2 grid steps for megacore
               -nb)                   # otherwise prefer smaller blocks
        if best_key is None or key > best_key:
            best_key, best = key, nb
    return best


# ----------------------------------------------------------------------------
# Wrapper
# ----------------------------------------------------------------------------
def psp_module_pallas(x, stage_weights, bottleneck_w, bottleneck_b,
                      sizes=(1, 2, 3, 6)):
    """x: (N, C, H, W) float32 (NCHW, as in PyTorch). Returns (N, OutC, H, W)."""
    N, C, H, W = x.shape
    HW = H * W
    S = len(sizes)
    OutC = bottleneck_w.shape[0]

    # --- spatial operators: pool+bilinear combined, stacked along lanes -----
    # TODO(synk): at production PSP resolutions apply Ah/Aw separably (two small
    # matmuls per stage) instead of materializing the (HW x HW) Kronecker
    # operator, which would not fit VMEM (especially v7x's 64 MiB).
    kt_cols = []
    for sz in sizes:
        Ah = bilinear_upsample_matrix(H, sz) @ adaptive_pool_matrix(H, sz)   # (H, H)
        Aw = bilinear_upsample_matrix(W, sz) @ adaptive_pool_matrix(W, sz)   # (W, W)
        kt_cols.append(np.kron(Ah, Aw).T)                                    # (HW, HW)
    kt = jnp.asarray(np.concatenate(kt_cols, axis=1), jnp.bfloat16)          # (HW, S*HW)

    # --- fold the per-stage 1x1 convs into the bottleneck weight -------------
    wb = jnp.asarray(bottleneck_w, jnp.float32)
    cols = []
    for g in range(S):
        cols.append(wb[:, g * C:(g + 1) * C] @ jnp.asarray(stage_weights[g], jnp.float32))
    cols.append(wb[:, S * C:(S + 1) * C])                 # identity branch columns
    wf = jnp.concatenate(cols, axis=1)                    # (OutC, (S+1)*C)
    bb = jnp.asarray(bottleneck_b, jnp.float32).reshape(OutC, 1)

    x_rows = x.reshape(N * C, HW).astype(jnp.bfloat16)    # (N*C, HW)

    NB = _pick_block_batch(N, C, HW)
    grid_n = N // NB
    kernel = _make_psp_kernel(NB, C, S, HW)

    out_slab = pl.pallas_call(
        kernel,
        out_shape=jax.ShapeDtypeStruct((OutC, N * HW), jnp.float32),
        grid=(grid_n,),
        in_specs=[
            pl.BlockSpec((NB * C, HW), lambda i: (i, 0)),
            pl.BlockSpec((HW, S * HW), lambda i: (0, 0)),
            pl.BlockSpec((OutC, (S + 1) * C), lambda i: (0, 0)),
            pl.BlockSpec((OutC, 1), lambda i: (0, 0)),
        ],
        out_specs=pl.BlockSpec((OutC, NB * HW), lambda i: (0, i)),
        scratch_shapes=[pltpu.VMEM(((S + 1) * C, NB * HW), jnp.float32)],
        compiler_params=pltpu.CompilerParams(
            dimension_semantics=("parallel",)),
    )(x_rows, kt, wf, bb)

    # (OutC, N*HW) -> (N, OutC, H, W): lane-dense kernel output, layout fixed
    # up with plain XLA reshape/transpose (glue).
    return out_slab.reshape(OutC, N, H, W).transpose(1, 0, 2, 3)


# ----------------------------------------------------------------------------
# Pure-JAX reference (pool / conv / upsample as separate f32 ops) for checking.
# ----------------------------------------------------------------------------
def psp_module_ref(x, stage_weights, bottleneck_w, bottleneck_b,
                   sizes=(1, 2, 3, 6)):
    N, C, H, W = x.shape
    priors = []
    for si, s in enumerate(sizes):
        Ph = jnp.asarray(adaptive_pool_matrix(H, s))
        Pw = jnp.asarray(adaptive_pool_matrix(W, s))
        Uh = jnp.asarray(bilinear_upsample_matrix(H, s))
        Uw = jnp.asarray(bilinear_upsample_matrix(W, s))
        pooled = jnp.einsum('ih,nchw,jw->ncij', Ph, x, Pw)
        conv = jnp.einsum('oc,ncij->noij', stage_weights[si], pooled)
        up = jnp.einsum('Ii,noij,Jj->noIJ', Uh, conv, Uw)
        priors.append(up)
    cat = jnp.concatenate(priors + [x], axis=1)
    out = jnp.einsum('oc,nchw->nohw', bottleneck_w, cat) + bottleneck_b[None, :, None, None]
    return jnp.maximum(out, 0.0)


if __name__ == "__main__":
    # Small shapes consistent with the module: features=C, sizes=(1,2,3,6).
    N, C, H, W = 2, 4, 16, 16
    OUT_C = 32
    SIZES = (1, 2, 3, 6)

    key = jax.random.PRNGKey(0)
    k_x, k_w1, k_wb, k_bb = jax.random.split(key, 4)

    x = jax.random.normal(k_x, (N, C, H, W), jnp.float32)
    # per-stage 1x1 conv weights (features -> features, bias=False)
    stage_w = jax.random.normal(k_w1, (len(SIZES), C, C), jnp.float32) * 0.1
    # bottleneck 1x1 conv: features*(len(sizes)+1) -> out_features, with bias
    bottle_w = jax.random.normal(k_wb, (OUT_C, C * (len(SIZES) + 1)), jnp.float32) * 0.1
    bottle_b = jax.random.normal(k_bb, (OUT_C,), jnp.float32) * 0.1

    out = psp_module_pallas(x, stage_w, bottle_w, bottle_b, SIZES)
    out = jax.block_until_ready(out)

    ref = psp_module_ref(x, stage_w, bottle_w, bottle_b, SIZES)
    assert out.shape == (N, OUT_C, H, W)
    # bf16 matmul inputs (f32 accumulation) -> loosen tolerance vs the f32 ref.
    np.testing.assert_allclose(np.asarray(out), np.asarray(ref),
                               rtol=2e-2, atol=2e-2)

    print("KERNEL_OK")
</pallas_src>

<mosaic_0001>
module attributes {stable_mosaic.version = 11 : i64} {
  func.func @kernel(%arg0: i32, %arg1: memref<8x256xbf16, #tpu.memory_space<vmem>>, %arg2: memref<256x1024xbf16, #tpu.memory_space<vmem>>, %arg3: memref<32x20xf32, #tpu.memory_space<vmem>>, %arg4: memref<32x1xf32, #tpu.memory_space<vmem>>, %arg5: memref<32x512xf32, #tpu.memory_space<vmem>>, %arg6: memref<20x512xf32, #tpu.memory_space<vmem>>) attributes {dimension_semantics = [#tpu.dimension_semantics<parallel>], iteration_bounds = array<i64: 1>, scalar_prefetch = 0 : i64, scratch_operands = 1 : i64, tpu.core_type = #tpu.core_type<tc>, window_params = [{transform_indices = @transform_0, window_bounds = array<i64: 8, 256>}, {pipeline_mode = #tpu.pipeline_mode<synchronous>, transform_indices = @transform_1, window_bounds = array<i64: 256, 1024>}, {pipeline_mode = #tpu.pipeline_mode<synchronous>, transform_indices = @transform_2, window_bounds = array<i64: 32, 20>}, {pipeline_mode = #tpu.pipeline_mode<synchronous>, transform_indices = @transform_3, window_bounds = array<i64: 32, 1>}, {transform_indices = @transform_4, window_bounds = array<i64: 32, 512>}]} {
    %c0 = arith.constant 0 : index
    %c0_0 = arith.constant 0 : index
    %0 = vector.load %arg1[%c0, %c0_0] : memref<8x256xbf16, #tpu.memory_space<vmem>>, vector<8x256xbf16>
    %c0_1 = arith.constant 0 : index
    %c0_2 = arith.constant 0 : index
    %1 = vector.load %arg2[%c0_1, %c0_2] : memref<256x1024xbf16, #tpu.memory_space<vmem>>, vector<256x1024xbf16>
    %cst = arith.constant dense<0.000000e+00> : vector<8x1024xf32>
    %2 = tpu.matmul %0, %1, %cst {dimension_numbers = #tpu.dot_dimension_numbers<[1], [0], [0], [1], [0, 0, 1, 1], [], []>} : vector<8x256xbf16>, vector<256x1024xbf16>, vector<8x1024xf32> -> vector<8x1024xf32>
    %3 = vector.extract_strided_slice %2 {offsets = [0, 0], sizes = [4, 256], strides = [1, 1]} : vector<8x1024xf32> to vector<4x256xf32>
    %c0_3 = arith.constant 0 : index
    %c0_4 = arith.constant 0 : index
    %4 = vector.load %arg6[%c0_3, %c0_4] : memref<20x512xf32, #tpu.memory_space<vmem>>, vector<4x256xf32>
    tpu.vector_store %arg6[%c0_3, %c0_4], %3 {strides = array<i32>} : memref<20x512xf32, #tpu.memory_space<vmem>>, vector<4x256xf32>,
    %5 = vector.extract_strided_slice %2 {offsets = [0, 256], sizes = [4, 256], strides = [1, 1]} : vector<8x1024xf32> to vector<4x256xf32>
    %c4 = arith.constant 4 : index
    %c0_5 = arith.constant 0 : index
    %6 = vector.load %arg6[%c4, %c0_5] : memref<20x512xf32, #tpu.memory_space<vmem>>, vector<4x256xf32>
    tpu.vector_store %arg6[%c4, %c0_5], %5 {strides = array<i32>} : memref<20x512xf32, #tpu.memory_space<vmem>>, vector<4x256xf32>,
    %7 = vector.extract_strided_slice %2 {offsets = [0, 512], sizes = [4, 256], strides = [1, 1]} : vector<8x1024xf32> to vector<4x256xf32>
    %c8 = arith.constant 8 : index
    %c0_6 = arith.constant 0 : index
    %8 = vector.load %arg6[%c8, %c0_6] : memref<20x512xf32, #tpu.memory_space<vmem>>, vector<4x256xf32>
    tpu.vector_store %arg6[%c8, %c0_6], %7 {strides = array<i32>} : memref<20x512xf32, #tpu.memory_space<vmem>>, vector<4x256xf32>,
    %9 = vector.extract_strided_slice %2 {offsets = [0, 768], sizes = [4, 256], strides = [1, 1]} : vector<8x1024xf32> to vector<4x256xf32>
    %c12 = arith.constant 12 : index
    %c0_7 = arith.constant 0 : index
    %10 = vector.load %arg6[%c12, %c0_7] : memref<20x512xf32, #tpu.memory_space<vmem>>, vector<4x256xf32>
    tpu.vector_store %arg6[%c12, %c0_7], %9 {strides = array<i32>} : memref<20x512xf32, #tpu.memory_space<vmem>>, vector<4x256xf32>,
    %11 = vector.extract_strided_slice %0 {offsets = [0, 0], sizes = [4, 256], strides = [1, 1]} : vector<8x256xbf16> to vector<4x256xbf16>
    %12 = arith.extf %11 : vector<4x256xbf16> to vector<4x256xf32>
    %c16 = arith.constant 16 : index
    %c0_8 = arith.constant 0 : index
    %13 = vector.load %arg6[%c16, %c0_8] : memref<20x512xf32, #tpu.memory_space<vmem>>, vector<4x256xf32>
    tpu.vector_store %arg6[%c16, %c0_8], %12 {strides = array<i32>} : memref<20x512xf32, #tpu.memory_space<vmem>>, vector<4x256xf32>,
    %14 = vector.extract_strided_slice %2 {offsets = [4, 0], sizes = [4, 256], strides = [1, 1]} : vector<8x1024xf32> to vector<4x256xf32>
    %c0_9 = arith.constant 0 : index
    %c256 = arith.constant 256 : index
    %15 = vector.load %arg6[%c0_9, %c256] : memref<20x512xf32, #tpu.memory_space<vmem>>, vector<4x256xf32>
    tpu.vector_store %arg6[%c0_9, %c256], %14 {strides = array<i32>} : memref<20x512xf32, #tpu.memory_space<vmem>>, vector<4x256xf32>,
    %16 = vector.extract_strided_slice %2 {offsets = [4, 256], sizes = [4, 256], strides = [1, 1]} : vector<8x1024xf32> to vector<4x256xf32>
    %c4_10 = arith.constant 4 : index
    %c256_11 = arith.constant 256 : index
    %17 = vector.load %arg6[%c4_10, %c256_11] : memref<20x512xf32, #tpu.memory_space<vmem>>, vector<4x256xf32>
    tpu.vector_store %arg6[%c4_10, %c256_11], %16 {strides = array<i32>} : memref<20x512xf32, #tpu.memory_space<vmem>>, vector<4x256xf32>,
    %18 = vector.extract_strided_slice %2 {offsets = [4, 512], sizes = [4, 256], strides = [1, 1]} : vector<8x1024xf32> to vector<4x256xf32>
    %c8_12 = arith.constant 8 : index
    %c256_13 = arith.constant 256 : index
    %19 = vector.load %arg6[%c8_12, %c256_13] : memref<20x512xf32, #tpu.memory_space<vmem>>, vector<4x256xf32>
    tpu.vector_store %arg6[%c8_12, %c256_13], %18 {strides = array<i32>} : memref<20x512xf32, #tpu.memory_space<vmem>>, vector<4x256xf32>,
    %20 = vector.extract_strided_slice %2 {offsets = [4, 768], sizes = [4, 256], strides = [1, 1]} : vector<8x1024xf32> to vector<4x256xf32>
    %c12_14 = arith.constant 12 : index
    %c256_15 = arith.constant 256 : index
    %21 = vector.load %arg6[%c12_14, %c256_15] : memref<20x512xf32, #tpu.memory_space<vmem>>, vector<4x256xf32>
    tpu.vector_store %arg6[%c12_14, %c256_15], %20 {strides = array<i32>} : memref<20x512xf32, #tpu.memory_space<vmem>>, vector<4x256xf32>,
    %22 = vector.extract_strided_slice %0 {offsets = [4, 0], sizes = [4, 256], strides = [1, 1]} : vector<8x256xbf16> to vector<4x256xbf16>
    %23 = arith.extf %22 : vector<4x256xbf16> to vector<4x256xf32>
    %c16_16 = arith.constant 16 : index
    %c256_17 = arith.constant 256 : index
    %24 = vector.load %arg6[%c16_16, %c256_17] : memref<20x512xf32, #tpu.memory_space<vmem>>, vector<4x256xf32>
    tpu.vector_store %arg6[%c16_16, %c256_17], %23 {strides = array<i32>} : memref<20x512xf32, #tpu.memory_space<vmem>>, vector<4x256xf32>,
    %c0_18 = arith.constant 0 : index
    %c0_19 = arith.constant 0 : index
    %25 = vector.load %arg3[%c0_18, %c0_19] : memref<32x20xf32, #tpu.memory_space<vmem>>, vector<32x20xf32>
    %c0_20 = arith.constant 0 : index
    %c0_21 = arith.constant 0 : index
    %26 = vector.load %arg6[%c0_20, %c0_21] : memref<20x512xf32, #tpu.memory_space<vmem>>, vector<20x512xf32>
    %cst_22 = arith.constant dense<0.000000e+00> : vector<32x512xf32>
    %27 = tpu.matmul %25, %26, %cst_22 {dimension_numbers = #tpu.dot_dimension_numbers<[1], [0], [0], [1], [0, 0, 1, 1], [], []>} : vector<32x20xf32>, vector<20x512xf32>, vector<32x512xf32> -> vector<32x512xf32>
    %c0_23 = arith.constant 0 : index
    %c0_24 = arith.constant 0 : index
    %28 = vector.load %arg4[%c0_23, %c0_24] : memref<32x1xf32, #tpu.memory_space<vmem>>, vector<32x1xf32>
    %29 = vector.broadcast %28 : vector<32x1xf32> to vector<32x512xf32>
    %30 = arith.addf %27, %29 : vector<32x512xf32>
    %cst_25 = arith.constant 0.000000e+00 : f32
    %31 = vector.broadcast %cst_25 : f32 to vector<32x512xf32>
    %32 = arith.maximumf %30, %31 : vector<32x512xf32>
    %c0_26 = arith.constant 0 : index
    %c0_27 = arith.constant 0 : index
    %33 = vector.load %arg5[%c0_26, %c0_27] : memref<32x512xf32, #tpu.memory_space<vmem>>, vector<32x512xf32>
    tpu.vector_store %arg5[%c0_26, %c0_27], %32 {strides = array<i32>} : memref<32x512xf32, #tpu.memory_space<vmem>>, vector<32x512xf32>,
    return
  }
  func.func @transform_0(%arg0: i32) -> (i32, i32) {
    %c0_i32 = arith.constant 0 : i32
    %c0_i32_0 = arith.constant 0 : i32
    return %arg0, %c0_i32 : i32, i32
  }
  func.func @transform_1(%arg0: i32) -> (i32, i32) {
    %c0_i32 = arith.constant 0 : i32
    %c0_i32_0 = arith.constant 0 : i32
    %c0_i32_1 = arith.constant 0 : i32
    return %c0_i32, %c0_i32_0 : i32, i32
  }
  func.func @transform_2(%arg0: i32) -> (i32, i32) {
    %c0_i32 = arith.constant 0 : i32
    %c0_i32_0 = arith.constant 0 : i32
    %c0_i32_1 = arith.constant 0 : i32
    return %c0_i32, %c0_i32_0 : i32, i32
  }
  func.func @transform_3(%arg0: i32) -> (i32, i32) {
    %c0_i32 = arith.constant 0 : i32
    %c0_i32_0 = arith.constant 0 : i32
    %c0_i32_1 = arith.constant 0 : i32
    return %c0_i32, %c0_i32_0 : i32, i32
  }
  func.func @transform_4(%arg0: i32) -> (i32, i32) {
    %c0_i32 = arith.constant 0 : i32
    %c0_i32_0 = arith.constant 0 : i32
    return %c0_i32, %arg0 : i32, i32
  }
}

</mosaic_0001>

<llo_original>
// kernel: tpu_custom_call.1
$region0: #{tpu_custom_call.1}
  #allocation0 [shape = 'u32[]', space=smem, size = 0x4, offset = 0x4, fixed_abs, tag = 'smem constant byte address 0x4 - core index']
  #allocation1 [shape = 'u32[144,128]{1,0:T(1,128)}', space=vmem, size = 0x12000, scoped, tag = 'internal scratch']
  #allocation2 [shape = 'f32[20,512]{1,0:T(8,128)}', space=vmem, size = 0xc000, scoped, tag = 'scratch operand']
  %s0 = inlined_call_operand.vmem [shape: bf16[8,256], index: 0, kind: input, shape index: {}]
  %s1 = inlined_call_operand.hbm [shape: bf16[256,1024], index: 1, kind: input, shape index: {}]
  %s2 = inlined_call_operand.vmem [shape: f32[32,20], index: 2, kind: input, shape index: {}]
  %s3 = inlined_call_operand.vmem [shape: f32[32,1], index: 3, kind: input, shape index: {}]
  %s4 = inlined_call_operand.hbm [shape: f32[32,512], index: 4, kind: output, shape index: {}]
  %s5 = sld [smem:[#allocation0]]
  $region30: #{tpu_custom_call.1} parent=0
    _
  %s7 = ssub.s32 1, %s5
  %s8 = scalar_select 0, %s7, %s5
  $region1: #{tpu_custom_call.1} parent=0
    #allocation3 [shape = 'u8[524288]{0}', space=vmem, size = 0x80000, scoped, tag = 'input window, operand 1, single buffered']
    #allocation4 [shape = 's32[1]{0}', space=sflag, size = 0x4, scoped, tag = 'scoped memory for tpu_custom_call.1']
    #allocation5 [shape = 's32[1]{0}', space=sflag, size = 0x4, scoped, tag = 'scoped memory for tpu_custom_call.1']
    #allocation6 [shape = 'u8[65536]{0}', space=vmem, size = 0x10000, scoped, tag = 'output window, operand 0, single buffered']
    %9 = vsyncpa [#allocation4], 0
    %10 = vsyncpa [#allocation5], 0
    // Predicated region
    $region2: #{tpu_custom_call.1} parent=1 // pred_check
      _
    $region3: #{tpu_custom_call.1} parent=1 // pred_check_branch
      %12 = sbr.rel (0) target = $region5
    $region4: #{tpu_custom_call.1} parent=1 // pred_region
      _
    $region5: #{tpu_custom_call.1} parent=1 // pred_fallthru
      _
    // Predicated region
    $region6: #{tpu_custom_call.1} parent=1 // pred_check
      _
    $region7: #{tpu_custom_call.1} parent=1 // pred_check_branch
      %14 = sbr.rel (0) target = $region9
    $region8: #{tpu_custom_call.1} parent=1 // pred_region
      %s16 = ssub.s32 16384, 16384
      %17 = vsyncadd [#allocation4], %s16
      %s18 = sshll.u32 [#allocation3], 4
      %s19 = int_to_ptr.vmem [resolvable:$true] %s18
      %24 = dma.hbm_to_vmem [thread:$0]  %s1, 16384, %s19, [#allocation4], 512, 512, 32
    $region9: #{tpu_custom_call.1} parent=1 // pred_fallthru
      _
    // Predicated region
    $region10: #{tpu_custom_call.1} parent=1 // pred_check
      _
    $region11: #{tpu_custom_call.1} parent=1 // pred_check_branch
      %26 = sbr.rel (0) target = $region13
    $region12: #{tpu_custom_call.1} parent=1 // pred_region
      _
    $region13: #{tpu_custom_call.1} parent=1 // pred_fallthru
      _
    // Predicated region
    $region14: #{tpu_custom_call.1} parent=1 // pred_check
      _
    $region15: #{tpu_custom_call.1} parent=1 // pred_check_branch
      %28 = sbr.rel (0) target = $region17
    $region16: #{tpu_custom_call.1} parent=1 // pred_region
      _
    $region17: #{tpu_custom_call.1} parent=1 // pred_fallthru
      _
    // Predicated region
    $region18: #{tpu_custom_call.1} parent=1 // pred_check
      _
    $region19: #{tpu_custom_call.1} parent=1 // pred_check_branch
      %30 = sbr.rel (0) target = $region21
    $region20: #{tpu_custom_call.1} parent=1 // pred_region
      %31 = dma.done [#allocation4], 16384
    $region21: #{tpu_custom_call.1} parent=1 // pred_fallthru
      _
    %v32 = vld [vmem:[%s0] sm:$0xff]
    %v33 = vld [vmem:[#allocation3] sm:$0xff]
    %v34 = vld [vmem:[#allocation3 + $0x8] sm:$0xff]
    %v35 = vld [vmem:[#allocation3 + $0x10] sm:$0xff]
    %v36 = vld [vmem:[#allocation3 + $0x18] sm:$0xff]
    %v37 = vld [vmem:[#allocation3 + $0x20] sm:$0xff]
    %v38 = vld [vmem:[#allocation3 + $0x28] sm:$0xff]
    %v39 = vld [vmem:[#allocation3 + $0x30] sm:$0xff]
    %v40 = vld [vmem:[#allocation3 + $0x38] sm:$0xff]
    %v41 = vld [vmem:[#allocation3 + $0x40] sm:$0xff]
    %v42 = vld [vmem:[#allocation3 + $0x48] sm:$0xff]
    %v43 = vld [vmem:[#allocation3 + $0x50] sm:$0xff]
    %v44 = vld [vmem:[#allocation3 + $0x58] sm:$0xff]
    %v45 = vld [vmem:[#allocation3 + $0x60] sm:$0xff]
    %v46 = vld [vmem:[#allocation3 + $0x68] sm:$0xff]
    %v47 = vld [vmem:[#allocation3 + $0x70] sm:$0xff]
    %v48 = vld [vmem:[#allocation3 + $0x78] sm:$0xff]
    %v49 = vld [vmem:[#allocation3 + $0x80] sm:$0xff]
    %v50 = vld [vmem:[#allocation3 + $0x88] sm:$0xff]
    %v51 = vld [vmem:[#allocation3 + $0x90] sm:$0xff]
    %v52 = vld [vmem:[#allocation3 + $0x98] sm:$0xff]
    %v53 = vld [vmem:[#allocation3 + $0xa0] sm:$0xff]
    %v54 = vld [vmem:[#allocation3 + $0xa8] sm:$0xff]
    %v55 = vld [vmem:[#allocation3 + $0xb0] sm:$0xff]
    %v56 = vld [vmem:[#allocation3 + $0xb8] sm:$0xff]
    %v57 = vld [vmem:[#allocation3 + $0xc0] sm:$0xff]
    %v58 = vld [vmem:[#allocation3 + $0xc8] sm:$0xff]
    %v59 = vld [vmem:[#allocation3 + $0xd0] sm:$0xff]
    %v60 = vld [vmem:[#allocation3 + $0xd8] sm:$0xff]
    %v61 = vld [vmem:[#allocation3 + $0xe0] sm:$0xff]
    %v62 = vld [vmem:[#allocation3 + $0xe8] sm:$0xff]
    %v63 = vld [vmem:[#allocation3 + $0xf0] sm:$0xff]
    %v64 = vld [vmem:[#allocation3 + $0xf8] sm:$0xff]
    %v65 = vld [vmem:[#allocation3 + $0x100] sm:$0xff]
    %v66 = vld [vmem:[#allocation3 + $0x108] sm:$0xff]
    %v67 = vld [vmem:[#allocation3 + $0x110] sm:$0xff]
    %v68 = vld [vmem:[#allocation3 + $0x118] sm:$0xff]
    %v69 = vld [vmem:[#allocation3 + $0x120] sm:$0xff]
    %v70 = vld [vmem:[#allocation3 + $0x128] sm:$0xff]
    %v71 = vld [vmem:[#allocation3 + $0x130] sm:$0xff]
    %v72 = vld [vmem:[#allocation3 + $0x138] sm:$0xff]
    %v73 = vld [vmem:[#allocation3 + $0x140] sm:$0xff]
    %v74 = vld [vmem:[#allocation3 + $0x148] sm:$0xff]
    %v75 = vld [vmem:[#allocation3 + $0x150] sm:$0xff]
    %v76 = vld [vmem:[#allocation3 + $0x158] sm:$0xff]
    %v77 = vld [vmem:[#allocation3 + $0x160] sm:$0xff]
    %v78 = vld [vmem:[#allocation3 + $0x168] sm:$0xff]
    %v79 = vld [vmem:[#allocation3 + $0x170] sm:$0xff]
    %v80 = vld [vmem:[#allocation3 + $0x178] sm:$0xff]
    %v81 = vld [vmem:[#allocation3 + $0x180] sm:$0xff]
    %v82 = vld [vmem:[#allocation3 + $0x188] sm:$0xff]
    %v83 = vld [vmem:[#allocation3 + $0x190] sm:$0xff]
    %v84 = vld [vmem:[#allocation3 + $0x198] sm:$0xff]
    %v85 = vld [vmem:[#allocation3 + $0x1a0] sm:$0xff]
    %v86 = vld [vmem:[#allocation3 + $0x1a8] sm:$0xff]
    %v87 = vld [vmem:[#allocation3 + $0x1b0] sm:$0xff]
    %v88 = vld [vmem:[#allocation3 + $0x1b8] sm:$0xff]
    %v89 = vld [vmem:[#allocation3 + $0x1c0] sm:$0xff]
    %v90 = vld [vmem:[#allocation3 + $0x1c8] sm:$0xff]
    %v91 = vld [vmem:[#allocation3 + $0x1d0] sm:$0xff]
    %v92 = vld [vmem:[#allocation3 + $0x1d8] sm:$0xff]
    %v93 = vld [vmem:[#allocation3 + $0x1e0] sm:$0xff]
    %v94 = vld [vmem:[#allocation3 + $0x1e8] sm:$0xff]
    %v95 = vld [vmem:[#allocation3 + $0x1f0] sm:$0xff]
    %v96 = vld [vmem:[#allocation3 + $0x1f8] sm:$0xff]
    %v97 = vld [vmem:[#allocation3 + $0x200] sm:$0xff]
    %v98 = vld [vmem:[#allocation3 + $0x208] sm:$0xff]
    %v99 = vld [vmem:[#allocation3 + $0x210] sm:$0xff]
    %v100 = vld [vmem:[#allocation3 + $0x218] sm:$0xff]
    %v101 = vld [vmem:[#allocation3 + $0x220] sm:$0xff]
    %v102 = vld [vmem:[#allocation3 + $0x228] sm:$0xff]
    %v103 = vld [vmem:[#allocation3 + $0x230] sm:$0xff]
    %v104 = vld [vmem:[#allocation3 + $0x238] sm:$0xff]
    %v105 = vld [vmem:[#allocation3 + $0x240] sm:$0xff]
    %v106 = vld [vmem:[#allocation3 + $0x248] sm:$0xff]
    %v107 = vld [vmem:[#allocation3 + $0x250] sm:$0xff]
    %v108 = vld [vmem:[#allocation3 + $0x258] sm:$0xff]
    %v109 = vld [vmem:[#allocation3 + $0x260] sm:$0xff]
    %v110 = vld [vmem:[#allocation3 + $0x268] sm:$0xff]
    %v111 = vld [vmem:[#allocation3 + $0x270] sm:$0xff]
    %v112 = vld [vmem:[#allocation3 + $0x278] sm:$0xff]
    %v113 = vld [vmem:[#allocation3 + $0x280] sm:$0xff]
    %v114 = vld [vmem:[#allocation3 + $0x288] sm:$0xff]
    %v115 = vld [vmem:[#allocation3 + $0x290] sm:$0xff]
    %v116 = vld [vmem:[#allocation3 + $0x298] sm:$0xff]
    %v117 = vld [vmem:[#allocation3 + $0x2a0] sm:$0xff]
    %v118 = vld [vmem:[#allocation3 + $0x2a8] sm:$0xff]
    %v119 = vld [vmem:[#allocation3 + $0x2b0] sm:$0xff]
    %v120 = vld [vmem:[#allocation3 + $0x2b8] sm:$0xff]
    %v121 = vld [vmem:[#allocation3 + $0x2c0] sm:$0xff]
    %v122 = vld [vmem:[#allocation3 + $0x2c8] sm:$0xff]
    %v123 = vld [vmem:[#allocation3 + $0x2d0] sm:$0xff]
    %v124 = vld [vmem:[#allocation3 + $0x2d8] sm:$0xff]
    %v125 = vld [vmem:[#allocation3 + $0x2e0] sm:$0xff]
    %v126 = vld [vmem:[#allocation3 + $0x2e8] sm:$0xff]
    %v127 = vld [vmem:[#allocation3 + $0x2f0] sm:$0xff]
    %v128 = vld [vmem:[#allocation3 + $0x2f8] sm:$0xff]
    %v129 = vld [vmem:[#allocation3 + $0x300] sm:$0xff]
    %v130 = vld [vmem:[#allocation3 + $0x308] sm:$0xff]
    %v131 = vld [vmem:[#allocation3 + $0x310] sm:$0xff]
    %v132 = vld [vmem:[#allocation3 + $0x318] sm:$0xff]
    %v133 = vld [vmem:[#allocation3 + $0x320] sm:$0xff]
    %v134 = vld [vmem:[#allocation3 + $0x328] sm:$0xff]
    %v135 = vld [vmem:[#allocation3 + $0x330] sm:$0xff]
    %v136 = vld [vmem:[#allocation3 + $0x338] sm:$0xff]
    %v137 = vld [vmem:[#allocation3 + $0x340] sm:$0xff]
    %v138 = vld [vmem:[#allocation3 + $0x348] sm:$0xff]
    %v139 = vld [vmem:[#allocation3 + $0x350] sm:$0xff]
    %v140 = vld [vmem:[#allocation3 + $0x358] sm:$0xff]
    %v141 = vld [vmem:[#allocation3 + $0x360] sm:$0xff]
    %v142 = vld [vmem:[#allocation3 + $0x368] sm:$0xff]
    %v143 = vld [vmem:[#allocation3 + $0x370] sm:$0xff]
    %v144 = vld [vmem:[#allocation3 + $0x378] sm:$0xff]
    %v145 = vld [vmem:[#allocation3 + $0x380] sm:$0xff]
    %v146 = vld [vmem:[#allocation3 + $0x388] sm:$0xff]
    %v147 = vld [vmem:[#allocation3 + $0x390] sm:$0xff]
    %v148 = vld [vmem:[#allocation3 + $0x398] sm:$0xff]
    %v149 = vld [vmem:[#allocation3 + $0x3a0] sm:$0xff]
    %v150 = vld [vmem:[#allocation3 + $0x3a8] sm:$0xff]
    %v151 = vld [vmem:[#allocation3 + $0x3b0] sm:$0xff]
    %v152 = vld [vmem:[#allocation3 + $0x3b8] sm:$0xff]
    %v153 = vld [vmem:[#allocation3 + $0x3c0] sm:$0xff]
    %v154 = vld [vmem:[#allocation3 + $0x3c8] sm:$0xff]
    %v155 = vld [vmem:[#allocation3 + $0x3d0] sm:$0xff]
    %v156 = vld [vmem:[#allocation3 + $0x3d8] sm:$0xff]
    %v157 = vld [vmem:[#allocation3 + $0x3e0] sm:$0xff]
    %v158 = vld [vmem:[#allocation3 + $0x3e8] sm:$0xff]
    %v159 = vld [vmem:[#allocation3 + $0x3f0] sm:$0xff]
    %v160 = vld [vmem:[#allocation3 + $0x3f8] sm:$0xff]
    %v162 = vunpack.c.l.b16 %v32
    %v163 = vunpack.c.h.b16 %v32
    %v164 = vpack.c.b16 %v162, %v162
    %v165 = vpack.c.b16 %v163, %v163
    %v296 = vunpack.c.l.b16 %v33
    %v297 = vunpack.c.h.b16 %v33
    %v298 = vunpack.c.l.b16 %v34
    %v299 = vunpack.c.h.b16 %v34
    %v300 = vunpack.c.l.b16 %v35
    %v301 = vunpack.c.h.b16 %v35
    %v302 = vunpack.c.l.b16 %v36
    %v303 = vunpack.c.h.b16 %v36
    %v304 = vunpack.c.l.b16 %v37
    %v305 = vunpack.c.h.b16 %v37
    %v306 = vunpack.c.l.b16 %v38
    %v307 = vunpack.c.h.b16 %v38
    %v308 = vunpack.c.l.b16 %v39
    %v309 = vunpack.c.h.b16 %v39
    %v310 = vunpack.c.l.b16 %v40
    %v311 = vunpack.c.h.b16 %v40
    %v312 = vunpack.c.l.b16 %v41
    %v313 = vunpack.c.h.b16 %v41
    %v314 = vunpack.c.l.b16 %v42
    %v315 = vunpack.c.h.b16 %v42
    %v316 = vunpack.c.l.b16 %v43
    %v317 = vunpack.c.h.b16 %v43
    %v318 = vunpack.c.l.b16 %v44
    %v319 = vunpack.c.h.b16 %v44
    %v320 = vunpack.c.l.b16 %v45
    %v321 = vunpack.c.h.b16 %v45
    %v322 = vunpack.c.l.b16 %v46
    %v323 = vunpack.c.h.b16 %v46
    %v324 = vunpack.c.l.b16 %v47
    %v325 = vunpack.c.h.b16 %v47
    %v326 = vunpack.c.l.b16 %v48
    %v327 = vunpack.c.h.b16 %v48
    %v328 = vunpack.c.l.b16 %v49
    %v329 = vunpack.c.h.b16 %v49
    %v330 = vunpack.c.l.b16 %v50
    %v331 = vunpack.c.h.b16 %v50
    %v332 = vunpack.c.l.b16 %v51
    %v333 = vunpack.c.h.b16 %v51
    %v334 = vunpack.c.l.b16 %v52
    %v335 = vunpack.c.h.b16 %v52
    %v336 = vunpack.c.l.b16 %v53
    %v337 = vunpack.c.h.b16 %v53
    %v338 = vunpack.c.l.b16 %v54
    %v339 = vunpack.c.h.b16 %v54
    %v340 = vunpack.c.l.b16 %v55
    %v341 = vunpack.c.h.b16 %v55
    %v342 = vunpack.c.l.b16 %v56
    %v343 = vunpack.c.h.b16 %v56
    %v344 = vunpack.c.l.b16 %v57
    %v345 = vunpack.c.h.b16 %v57
    %v346 = vunpack.c.l.b16 %v58
    %v347 = vunpack.c.h.b16 %v58
    %v348 = vunpack.c.l.b16 %v59
    %v349 = vunpack.c.h.b16 %v59
    %v350 = vunpack.c.l.b16 %v60
    %v351 = vunpack.c.h.b16 %v60
    %v352 = vunpack.c.l.b16 %v61
    %v353 = vunpack.c.h.b16 %v61
    %v354 = vunpack.c.l.b16 %v62
    %v355 = vunpack.c.h.b16 %v62
    %v356 = vunpack.c.l.b16 %v63
    %v357 = vunpack.c.h.b16 %v63
    %v358 = vunpack.c.l.b16 %v64
    %v359 = vunpack.c.h.b16 %v64
    %v360 = vunpack.c.l.b16 %v65
    %v361 = vunpack.c.h.b16 %v65
    %v362 = vunpack.c.l.b16 %v66
    %v363 = vunpack.c.h.b16 %v66
    %v364 = vunpack.c.l.b16 %v67
    %v365 = vunpack.c.h.b16 %v67
    %v366 = vunpack.c.l.b16 %v68
    %v367 = vunpack.c.h.b16 %v68
    %v368 = vunpack.c.l.b16 %v69
    %v369 = vunpack.c.h.b16 %v69
    %v370 = vunpack.c.l.b16 %v70
    %v371 = vunpack.c.h.b16 %v70
    %v372 = vunpack.c.l.b16 %v71
    %v373 = vunpack.c.h.b16 %v71
    %v374 = vunpack.c.l.b16 %v72
    %v375 = vunpack.c.h.b16 %v72
    %v376 = vunpack.c.l.b16 %v73
    %v377 = vunpack.c.h.b16 %v73
    %v378 = vunpack.c.l.b16 %v74
    %v379 = vunpack.c.h.b16 %v74
    %v380 = vunpack.c.l.b16 %v75
    %v381 = vunpack.c.h.b16 %v75
    %v382 = vunpack.c.l.b16 %v76
    %v383 = vunpack.c.h.b16 %v76
    %v384 = vunpack.c.l.b16 %v77
    %v385 = vunpack.c.h.b16 %v77
    %v386 = vunpack.c.l.b16 %v78
    %v387 = vunpack.c.h.b16 %v78
    %v388 = vunpack.c.l.b16 %v79
    %v389 = vunpack.c.h.b16 %v79
    %v390 = vunpack.c.l.b16 %v80
    %v391 = vunpack.c.h.b16 %v80
    %v392 = vunpack.c.l.b16 %v81
    %v393 = vunpack.c.h.b16 %v81
    %v394 = vunpack.c.l.b16 %v82
    %v395 = vunpack.c.h.b16 %v82
    %v396 = vunpack.c.l.b16 %v83
    %v397 = vunpack.c.h.b16 %v83
    %v398 = vunpack.c.l.b16 %v84
    %v399 = vunpack.c.h.b16 %v84
    %v400 = vunpack.c.l.b16 %v85
    %v401 = vunpack.c.h.b16 %v85
    %v402 = vunpack.c.l.b16 %v86
    %v403 = vunpack.c.h.b16 %v86
    %v404 = vunpack.c.l.b16 %v87
    %v405 = vunpack.c.h.b16 %v87
    %v406 = vunpack.c.l.b16 %v88
    %v407 = vunpack.c.h.b16 %v88
    %v408 = vunpack.c.l.b16 %v89
    %v409 = vunpack.c.h.b16 %v89
    %v410 = vunpack.c.l.b16 %v90
    %v411 = vunpack.c.h.b16 %v90
    %v412 = vunpack.c.l.b16 %v91
    %v413 = vunpack.c.h.b16 %v91
    %v414 = vunpack.c.l.b16 %v92
    %v415 = vunpack.c.h.b16 %v92
    %v416 = vunpack.c.l.b16 %v93
    %v417 = vunpack.c.h.b16 %v93
    %v418 = vunpack.c.l.b16 %v94
    %v419 = vunpack.c.h.b16 %v94
    %v420 = vunpack.c.l.b16 %v95
    %v421 = vunpack.c.h.b16 %v95
    %v422 = vunpack.c.l.b16 %v96
    %v423 = vunpack.c.h.b16 %v96
    %v424 = vunpack.c.l.b16 %v97
    %v425 = vunpack.c.h.b16 %v97
    %v426 = vunpack.c.l.b16 %v98
    %v427 = vunpack.c.h.b16 %v98
    %v428 = vunpack.c.l.b16 %v99
    %v429 = vunpack.c.h.b16 %v99
    %v430 = vunpack.c.l.b16 %v100
    %v431 = vunpack.c.h.b16 %v100
    %v432 = vunpack.c.l.b16 %v101
    %v433 = vunpack.c.h.b16 %v101
    %v434 = vunpack.c.l.b16 %v102
    %v435 = vunpack.c.h.b16 %v102
    %v436 = vunpack.c.l.b16 %v103
    %v437 = vunpack.c.h.b16 %v103
    %v438 = vunpack.c.l.b16 %v104
    %v439 = vunpack.c.h.b16 %v104
    %v440 = vunpack.c.l.b16 %v105
    %v441 = vunpack.c.h.b16 %v105
    %v442 = vunpack.c.l.b16 %v106
    %v443 = vunpack.c.h.b16 %v106
    %v444 = vunpack.c.l.b16 %v107
    %v445 = vunpack.c.h.b16 %v107
    %v446 = vunpack.c.l.b16 %v108
    %v447 = vunpack.c.h.b16 %v108
    %v448 = vunpack.c.l.b16 %v109
    %v449 = vunpack.c.h.b16 %v109
    %v450 = vunpack.c.l.b16 %v110
    %v451 = vunpack.c.h.b16 %v110
    %v452 = vunpack.c.l.b16 %v111
    %v453 = vunpack.c.h.b16 %v111
    %v454 = vunpack.c.l.b16 %v112
    %v455 = vunpack.c.h.b16 %v112
    %v456 = vunpack.c.l.b16 %v113
    %v457 = vunpack.c.h.b16 %v113
    %v458 = vunpack.c.l.b16 %v114
    %v459 = vunpack.c.h.b16 %v114
    %v460 = vunpack.c.l.b16 %v115
    %v461 = vunpack.c.h.b16 %v115
    %v462 = vunpack.c.l.b16 %v116
    %v463 = vunpack.c.h.b16 %v116
    %v464 = vunpack.c.l.b16 %v117
    %v465 = vunpack.c.h.b16 %v117
    %v466 = vunpack.c.l.b16 %v118
    %v467 = vunpack.c.h.b16 %v118
    %v468 = vunpack.c.l.b16 %v119
    %v469 = vunpack.c.h.b16 %v119
    %v470 = vunpack.c.l.b16 %v120
    %v471 = vunpack.c.h.b16 %v120
    %v472 = vunpack.c.l.b16 %v121
    %v473 = vunpack.c.h.b16 %v121
    %v474 = vunpack.c.l.b16 %v122
    %v475 = vunpack.c.h.b16 %v122
    %v476 = vunpack.c.l.b16 %v123
    %v477 = vunpack.c.h.b16 %v123
    %v478 = vunpack.c.l.b16 %v124
    %v479 = vunpack.c.h.b16 %v124
    %v480 = vunpack.c.l.b16 %v125
    %v481 = vunpack.c.h.b16 %v125
    %v482 = vunpack.c.l.b16 %v126
    %v483 = vunpack.c.h.b16 %v126
    %v484 = vunpack.c.l.b16 %v127
    %v485 = vunpack.c.h.b16 %v127
    %v486 = vunpack.c.l.b16 %v128
    %v487 = vunpack.c.h.b16 %v128
    %v488 = vunpack.c.l.b16 %v129
    %v489 = vunpack.c.h.b16 %v129
    %v490 = vunpack.c.l.b16 %v130
    %v491 = vunpack.c.h.b16 %v130
    %v492 = vunpack.c.l.b16 %v131
    %v493 = vunpack.c.h.b16 %v131
    %v494 = vunpack.c.l.b16 %v132
    %v495 = vunpack.c.h.b16 %v132
    %v496 = vunpack.c.l.b16 %v133
    %v497 = vunpack.c.h.b16 %v133
    %v498 = vunpack.c.l.b16 %v134
    %v499 = vunpack.c.h.b16 %v134
    %v500 = vunpack.c.l.b16 %v135
    %v501 = vunpack.c.h.b16 %v135
    %v502 = vunpack.c.l.b16 %v136
    %v503 = vunpack.c.h.b16 %v136
    %v504 = vunpack.c.l.b16 %v137
    %v505 = vunpack.c.h.b16 %v137
    %v506 = vunpack.c.l.b16 %v138
    %v507 = vunpack.c.h.b16 %v138
    %v508 = vunpack.c.l.b16 %v139
    %v509 = vunpack.c.h.b16 %v139
    %v510 = vunpack.c.l.b16 %v140
    %v511 = vunpack.c.h.b16 %v140
    %v512 = vunpack.c.l.b16 %v141
    %v513 = vunpack.c.h.b16 %v141
    %v514 = vunpack.c.l.b16 %v142
    %v515 = vunpack.c.h.b16 %v142
    %v516 = vunpack.c.l.b16 %v143
    %v517 = vunpack.c.h.b16 %v143
    %v518 = vunpack.c.l.b16 %v144
    %v519 = vunpack.c.h.b16 %v144
    %v520 = vunpack.c.l.b16 %v145
    %v521 = vunpack.c.h.b16 %v145
    %v522 = vunpack.c.l.b16 %v146
    %v523 = vunpack.c.h.b16 %v146
    %v524 = vunpack.c.l.b16 %v147
    %v525 = vunpack.c.h.b16 %v147
    %v526 = vunpack.c.l.b16 %v148
    %v527 = vunpack.c.h.b16 %v148
    %v528 = vunpack.c.l.b16 %v149
    %v529 = vunpack.c.h.b16 %v149
    %v530 = vunpack.c.l.b16 %v150
    %v531 = vunpack.c.h.b16 %v150
    %v532 = vunpack.c.l.b16 %v151
    %v533 = vunpack.c.h.b16 %v151
    %v534 = vunpack.c.l.b16 %v152
    %v535 = vunpack.c.h.b16 %v152
    %v536 = vunpack.c.l.b16 %v153
    %v537 = vunpack.c.h.b16 %v153
    %v538 = vunpack.c.l.b16 %v154
    %v539 = vunpack.c.h.b16 %v154
    %v540 = vunpack.c.l.b16 %v155
    %v541 = vunpack.c.h.b16 %v155
    %v542 = vunpack.c.l.b16 %v156
    %v543 = vunpack.c.h.b16 %v156
    %v544 = vunpack.c.l.b16 %v157
    %v545 = vunpack.c.h.b16 %v157
    %v546 = vunpack.c.l.b16 %v158
    %v547 = vunpack.c.h.b16 %v158
    %v548 = vunpack.c.l.b16 %v159
    %v549 = vunpack.c.h.b16 %v159
    %v550 = vunpack.c.l.b16 %v160
    %v551 = vunpack.c.h.b16 %v160
    %v552 = vpack.c.b16 %v304, %v296
    %v553 = vpack.c.b16 %v305, %v297
    %v554 = vpack.c.b16 %v306, %v298
    %v555 = vpack.c.b16 %v307, %v299
    %v556 = vpack.c.b16 %v308, %v300
    %v557 = vpack.c.b16 %v309, %v301
    %v558 = vpack.c.b16 %v310, %v302
    %v559 = vpack.c.b16 %v311, %v303
    %v560 = vpack.c.b16 %v320, %v312
    %v561 = vpack.c.b16 %v321, %v313
    %v562 = vpack.c.b16 %v322, %v314
    %v563 = vpack.c.b16 %v323, %v315
    %v564 = vpack.c.b16 %v324, %v316
    %v565 = vpack.c.b16 %v325, %v317
    %v566 = vpack.c.b16 %v326, %v318
    %v567 = vpack.c.b16 %v327, %v319
    %v568 = vpack.c.b16 %v336, %v328
    %v569 = vpack.c.b16 %v337, %v329
    %v570 = vpack.c.b16 %v338, %v330
    %v571 = vpack.c.b16 %v339, %v331
    %v572 = vpack.c.b16 %v340, %v332
    %v573 = vpack.c.b16 %v341, %v333
    %v574 = vpack.c.b16 %v342, %v334
    %v575 = vpack.c.b16 %v343, %v335
    %v576 = vpack.c.b16 %v352, %v344
    %v577 = vpack.c.b16 %v353, %v345
    %v578 = vpack.c.b16 %v354, %v346
    %v579 = vpack.c.b16 %v355, %v347
    %v580 = vpack.c.b16 %v356, %v348
    %v581 = vpack.c.b16 %v357, %v349
    %v582 = vpack.c.b16 %v358, %v350
    %v583 = vpack.c.b16 %v359, %v351
    %v584 = vpack.c.b16 %v368, %v360
    %v585 = vpack.c.b16 %v369, %v361
    %v586 = vpack.c.b16 %v370, %v362
    %v587 = vpack.c.b16 %v371, %v363
    %v588 = vpack.c.b16 %v372, %v364
    %v589 = vpack.c.b16 %v373, %v365
    %v590 = vpack.c.b16 %v374, %v366
    %v591 = vpack.c.b16 %v375, %v367
    %v592 = vpack.c.b16 %v384, %v376
    %v593 = vpack.c.b16 %v385, %v377
    %v594 = vpack.c.b16 %v386, %v378
    %v595 = vpack.c.b16 %v387, %v379
    %v596 = vpack.c.b16 %v388, %v380
    %v597 = vpack.c.b16 %v389, %v381
    %v598 = vpack.c.b16 %v390, %v382
    %v599 = vpack.c.b16 %v391, %v383
    %v600 = vpack.c.b16 %v400, %v392
    %v601 = vpack.c.b16 %v401, %v393
    %v602 = vpack.c.b16 %v402, %v394
    %v603 = vpack.c.b16 %v403, %v395
    %v604 = vpack.c.b16 %v404, %v396
    %v605 = vpack.c.b16 %v405, %v397
    %v606 = vpack.c.b16 %v406, %v398
    %v607 = vpack.c.b16 %v407, %v399
    %v608 = vpack.c.b16 %v416, %v408
    %v609 = vpack.c.b16 %v417, %v409
    %v610 = vpack.c.b16 %v418, %v410
    %v611 = vpack.c.b16 %v419, %v411
    %v612 = vpack.c.b16 %v420, %v412
    %v613 = vpack.c.b16 %v421, %v413
    %v614 = vpack.c.b16 %v422, %v414
    %v615 = vpack.c.b16 %v423, %v415
    %v616 = vpack.c.b16 %v432, %v424
    %v617 = vpack.c.b16 %v433, %v425
    %v618 = vpack.c.b16 %v434, %v426
    %v619 = vpack.c.b16 %v435, %v427
    %v620 = vpack.c.b16 %v436, %v428
    %v621 = vpack.c.b16 %v437, %v429
    %v622 = vpack.c.b16 %v438, %v430
    %v623 = vpack.c.b16 %v439, %v431
    %v624 = vpack.c.b16 %v448, %v440
    %v625 = vpack.c.b16 %v449, %v441
    %v626 = vpack.c.b16 %v450, %v442
    %v627 = vpack.c.b16 %v451, %v443
    %v628 = vpack.c.b16 %v452, %v444
    %v629 = vpack.c.b16 %v453, %v445
    %v630 = vpack.c.b16 %v454, %v446
    %v631 = vpack.c.b16 %v455, %v447
    %v632 = vpack.c.b16 %v464, %v456
    %v633 = vpack.c.b16 %v465, %v457
    %v634 = vpack.c.b16 %v466, %v458
    %v635 = vpack.c.b16 %v467, %v459
    %v636 = vpack.c.b16 %v468, %v460
    %v637 = vpack.c.b16 %v469, %v461
    %v638 = vpack.c.b16 %v470, %v462
    %v639 = vpack.c.b16 %v471, %v463
    %v640 = vpack.c.b16 %v480, %v472
    %v641 = vpack.c.b16 %v481, %v473
    %v642 = vpack.c.b16 %v482, %v474
    %v643 = vpack.c.b16 %v483, %v475
    %v644 = vpack.c.b16 %v484, %v476
    %v645 = vpack.c.b16 %v485, %v477
    %v646 = vpack.c.b16 %v486, %v478
    %v647 = vpack.c.b16 %v487, %v479
    %v648 = vpack.c.b16 %v496, %v488
    %v649 = vpack.c.b16 %v497, %v489
    %v650 = vpack.c.b16 %v498, %v490
    %v651 = vpack.c.b16 %v499, %v491
    %v652 = vpack.c.b16 %v500, %v492
    %v653 = vpack.c.b16 %v501, %v493
    %v654 = vpack.c.b16 %v502, %v494
    %v655 = vpack.c.b16 %v503, %v495
    %v656 = vpack.c.b16 %v512, %v504
    %v657 = vpack.c.b16 %v513, %v505
    %v658 = vpack.c.b16 %v514, %v506
    %v659 = vpack.c.b16 %v515, %v507
    %v660 = vpack.c.b16 %v516, %v508
    %v661 = vpack.c.b16 %v517, %v509
    %v662 = vpack.c.b16 %v518, %v510
    %v663 = vpack.c.b16 %v519, %v511
    %v664 = vpack.c.b16 %v528, %v520
    %v665 = vpack.c.b16 %v529, %v521
    %v666 = vpack.c.b16 %v530, %v522
    %v667 = vpack.c.b16 %v531, %v523
    %v668 = vpack.c.b16 %v532, %v524
    %v669 = vpack.c.b16 %v533, %v525
    %v670 = vpack.c.b16 %v534, %v526
    %v671 = vpack.c.b16 %v535, %v527
    %v672 = vpack.c.b16 %v544, %v536
    %v673 = vpack.c.b16 %v545, %v537
    %v674 = vpack.c.b16 %v546, %v538
    %v675 = vpack.c.b16 %v547, %v539
    %v676 = vpack.c.b16 %v548, %v540
    %v677 = vpack.c.b16 %v549, %v541
    %v678 = vpack.c.b16 %v550, %v542
    %v679 = vpack.c.b16 %v551, %v543
    %808 = vmatprep.subr.bf16.mxu0 %v609
    %809 = vmatpush1.bf16.msra.mxu0 %v608
    %810 = vmatprep.subr.bf16.mxu0 %v601
    %811 = vmatpush1.bf16.msra.mxu0 %v600
    %812 = vmatprep.subr.bf16.mxu0 %v593
    %813 = vmatpush1.bf16.msra.mxu0 %v592
    %814 = vmatprep.subr.bf16.mxu0 %v585
    %815 = vmatpush1.bf16.msra.mxu0 %v584
    %816 = vmatprep.subr.bf16.mxu0 %v577
    %817 = vmatpush1.bf16.msra.mxu0 %v576
    %818 = vmatprep.subr.bf16.mxu0 %v569
    %819 = vmatpush1.bf16.msra.mxu0 %v568
    %820 = vmatprep.subr.bf16.mxu0 %v561
    %821 = vmatpush1.bf16.msra.mxu0 %v560
    %822 = vmatprep.subr.bf16.mxu0 %v553
    %823 = vmatpush1.bf16.msra.mxu0 %v552
    %824 = vmatprep.subr.bf16.mxu0 %v673
    %825 = vmatpush2.bf16.msra.mxu0 %v672
    %826 = vmatprep.subr.bf16.mxu0 %v665
    %827 = vmatpush2.bf16.msra.mxu0 %v664
    %828 = vmatprep.subr.bf16.mxu0 %v657
    %829 = vmatpush2.bf16.msra.mxu0 %v656
    %830 = vmatprep.subr.bf16.mxu0 %v649
    %831 = vmatpush2.bf16.msra.mxu0 %v648
    %832 = vmatprep.subr.bf16.mxu0 %v641
    %833 = vmatpush2.bf16.msra.mxu0 %v640
    %834 = vmatprep.subr.bf16.mxu0 %v633
    %835 = vmatpush2.bf16.msra.mxu0 %v632
    %836 = vmatprep.subr.bf16.mxu0 %v625
    %837 = vmatpush2.bf16.msra.mxu0 %v624
    %838 = vmatprep.subr.bf16.mxu0 %v617
    %839 = vmatpush2.bf16.msra.mxu0 %v616
    %840 = vmatprep.mubr.bf16.mxu0 %v165
    %841 = vmatmul.mubr.bf16.gmra.mxu0 %v164
    %v842 = vpop.f32.mrf.mxu0
    %v843 = vadd.f32 0.0, %v842
    %v844 = vpop.f32.mrf.mxu0
    %v845 = vadd.f32 0.0, %v844
    %v846 = vpop.f32.mrf.mxu0
    %v847 = vpop.f32.mrf.mxu0
    %848 = vdwg.mxu0
    %849 = vmatprep.subr.bf16.mxu0 %v611
    %850 = vmatpush1.bf16.msra.mxu0 %v610
    %851 = vmatprep.subr.bf16.mxu0 %v603
    %852 = vmatpush1.bf16.msra.mxu0 %v602
    %853 = vmatprep.subr.bf16.mxu0 %v595
    %854 = vmatpush1.bf16.msra.mxu0 %v594
    %855 = vmatprep.subr.bf16.mxu0 %v587
    %856 = vmatpush1.bf16.msra.mxu0 %v586
    %857 = vmatprep.subr.bf16.mxu0 %v579
    %858 = vmatpush1.bf16.msra.mxu0 %v578
    %859 = vmatprep.subr.bf16.mxu0 %v571
    %860 = vmatpush1.bf16.msra.mxu0 %v570
    %861 = vmatprep.subr.bf16.mxu0 %v563
    %862 = vmatpush1.bf16.msra.mxu0 %v562
    %863 = vmatprep.subr.bf16.mxu0 %v555
    %864 = vmatpush1.bf16.msra.mxu0 %v554
    %865 = vmatprep.subr.bf16.mxu0 %v675
    %866 = vmatpush2.bf16.msra.mxu0 %v674
    %867 = vmatprep.subr.bf16.mxu0 %v667
    %868 = vmatpush2.bf16.msra.mxu0 %v666
    %869 = vmatprep.subr.bf16.mxu0 %v659
    %870 = vmatpush2.bf16.msra.mxu0 %v658
    %871 = vmatprep.subr.bf16.mxu0 %v651
    %872 = vmatpush2.bf16.msra.mxu0 %v650
    %873 = vmatprep.subr.bf16.mxu0 %v643
    %874 = vmatpush2.bf16.msra.mxu0 %v642
    %875 = vmatprep.subr.bf16.mxu0 %v635
    %876 = vmatpush2.bf16.msra.mxu0 %v634
    %877 = vmatprep.subr.bf16.mxu0 %v627
    %878 = vmatpush2.bf16.msra.mxu0 %v626
    %879 = vmatprep.subr.bf16.mxu0 %v619
    %880 = vmatpush2.bf16.msra.mxu0 %v618
    %881 = vmatprep.mubr.bf16.mxu0 %v165
    %882 = vmatmul.mubr.bf16.gmra.mxu0 %v164
    %v883 = vpop.f32.mrf.mxu0
    %v884 = vadd.f32 0.0, %v883
    %v885 = vpop.f32.mrf.mxu0
    %v886 = vadd.f32 0.0, %v885
    %v887 = vpop.f32.mrf.mxu0
    %v888 = vpop.f32.mrf.mxu0
    %889 = vdwg.mxu0
    %890 = vmatprep.subr.bf16.mxu0 %v613
    %891 = vmatpush1.bf16.msra.mxu0 %v612
    %892 = vmatprep.subr.bf16.mxu0 %v605
    %893 = vmatpush1.bf16.msra.mxu0 %v604
    %894 = vmatprep.subr.bf16.mxu0 %v597
    %895 = vmatpush1.bf16.msra.mxu0 %v596
    %896 = vmatprep.subr.bf16.mxu0 %v589
    %897 = vmatpush1.bf16.msra.mxu0 %v588
    %898 = vmatprep.subr.bf16.mxu0 %v581
    %899 = vmatpush1.bf16.msra.mxu0 %v580
    %900 = vmatprep.subr.bf16.mxu0 %v573
    %901 = vmatpush1.bf16.msra.mxu0 %v572
    %902 = vmatprep.subr.bf16.mxu0 %v565
    %903 = vmatpush1.bf16.msra.mxu0 %v564
    %904 = vmatprep.subr.bf16.mxu0 %v557
    %905 = vmatpush1.bf16.msra.mxu0 %v556
    %906 = vmatprep.subr.bf16.mxu0 %v677
    %907 = vmatpush2.bf16.msra.mxu0 %v676
    %908 = vmatprep.subr.bf16.mxu0 %v669
    %909 = vmatpush2.bf16.msra.mxu0 %v668
    %910 = vmatprep.subr.bf16.mxu0 %v661
    %911 = vmatpush2.bf16.msra.mxu0 %v660
    %912 = vmatprep.subr.bf16.mxu0 %v653
    %913 = vmatpush2.bf16.msra.mxu0 %v652
    %914 = vmatprep.subr.bf16.mxu0 %v645
    %915 = vmatpush2.bf16.msra.mxu0 %v644
    %916 = vmatprep.subr.bf16.mxu0 %v637
    %917 = vmatpush2.bf16.msra.mxu0 %v636
    %918 = vmatprep.subr.bf16.mxu0 %v629
    %919 = vmatpush2.bf16.msra.mxu0 %v628
    %920 = vmatprep.subr.bf16.mxu0 %v621
    %921 = vmatpush2.bf16.msra.mxu0 %v620
    %922 = vmatprep.mubr.bf16.mxu0 %v165
    %923 = vmatmul.mubr.bf16.gmra.mxu0 %v164
    %v924 = vpop.f32.mrf.mxu0
    %v925 = vadd.f32 0.0, %v924
    %v926 = vpop.f32.mrf.mxu0
    %v927 = vadd.f32 0.0, %v926
    %v928 = vpop.f32.mrf.mxu0
    %v929 = vpop.f32.mrf.mxu0
    %930 = vdwg.mxu0
    %931 = vmatprep.subr.bf16.mxu0 %v615
    %932 = vmatpush1.bf16.msra.mxu0 %v614
    %933 = vmatprep.subr.bf16.mxu0 %v607
    %934 = vmatpush1.bf16.msra.mxu0 %v606
    %935 = vmatprep.subr.bf16.mxu0 %v599
    %936 = vmatpush1.bf16.msra.mxu0 %v598
    %937 = vmatprep.subr.bf16.mxu0 %v591
    %938 = vmatpush1.bf16.msra.mxu0 %v590
    %939 = vmatprep.subr.bf16.mxu0 %v583
    %940 = vmatpush1.bf16.msra.mxu0 %v582
    %941 = vmatprep.subr.bf16.mxu0 %v575
    %942 = vmatpush1.bf16.msra.mxu0 %v574
    %943 = vmatprep.subr.bf16.mxu0 %v567
    %944 = vmatpush1.bf16.msra.mxu0 %v566
    %945 = vmatprep.subr.bf16.mxu0 %v559
    %946 = vmatpush1.bf16.msra.mxu0 %v558
    %947 = vmatprep.subr.bf16.mxu0 %v679
    %948 = vmatpush2.bf16.msra.mxu0 %v678
    %949 = vmatprep.subr.bf16.mxu0 %v671
    %950 = vmatpush2.bf16.msra.mxu0 %v670
    %951 = vmatprep.subr.bf16.mxu0 %v663
    %952 = vmatpush2.bf16.msra.mxu0 %v662
    %953 = vmatprep.subr.bf16.mxu0 %v655
    %954 = vmatpush2.bf16.msra.mxu0 %v654
    %955 = vmatprep.subr.bf16.mxu0 %v647
    %956 = vmatpush2.bf16.msra.mxu0 %v646
    %957 = vmatprep.subr.bf16.mxu0 %v639
    %958 = vmatpush2.bf16.msra.mxu0 %v638
    %959 = vmatprep.subr.bf16.mxu0 %v631
    %960 = vmatpush2.bf16.msra.mxu0 %v630
    %961 = vmatprep.subr.bf16.mxu0 %v623
    %962 = vmatpush2.bf16.msra.mxu0 %v622
    %963 = vmatprep.mubr.bf16.mxu0 %v165
    %964 = vmatmul.mubr.bf16.gmra.mxu0 %v164
    %v965 = vpop.f32.mrf.mxu0
    %v966 = vadd.f32 0.0, %v965
    %v967 = vpop.f32.mrf.mxu0
    %v968 = vadd.f32 0.0, %v967
    %v969 = vpop.f32.mrf.mxu0
    %v970 = vpop.f32.mrf.mxu0
    %971 = vdwg.mxu0
    %972 = vst [vmem:[#allocation2] sm:$0xf] %v843
    %973 = vst [vmem:[#allocation2 + $0x8] sm:$0xf] %v845
    %v976 = vrot.slane %v884, 4
    %v977 = vrot.slane %v886, 4
    %980 = vst [vmem:[#allocation2] sm:$0xf0] %v976
    %981 = vst [vmem:[#allocation2 + $0x8] sm:$0xf0] %v977
    %982 = vst [vmem:[#allocation2 + $0x20] sm:$0xf] %v925
    %983 = vst [vmem:[#allocation2 + $0x28] sm:$0xf] %v927
    %v986 = vrot.slane %v966, 4
    %v987 = vrot.slane %v968, 4
    %990 = vst [vmem:[#allocation2 + $0x20] sm:$0xf0] %v986
    %991 = vst [vmem:[#allocation2 + $0x28] sm:$0xf0] %v987
    %v992 = vunpack.c.l.bf16 %v32
    %v993 = vunpack.c.h.bf16 %v32
    %994 = vst [vmem:[#allocation2 + $0x40] sm:$0xf] %v992
    %995 = vst [vmem:[#allocation2 + $0x48] sm:$0xf] %v993
    %v998 = vrot.slane %v843, 4
    %v999 = vrot.slane %v845, 4
    %1002 = vst [vmem:[#allocation2 + $0x10] sm:$0xf] %v998
    %1003 = vst [vmem:[#allocation2 + $0x18] sm:$0xf] %v999
    %1004 = vst [vmem:[#allocation2 + $0x10] sm:$0xf0] %v884
    %1005 = vst [vmem:[#allocation2 + $0x18] sm:$0xf0] %v886
    %v1008 = vrot.slane %v925, 4
    %v1009 = vrot.slane %v927, 4
    %1012 = vst [vmem:[#allocation2 + $0x30] sm:$0xf] %v1008
    %1013 = vst [vmem:[#allocation2 + $0x38] sm:$0xf] %v1009
    %1014 = vst [vmem:[#allocation2 + $0x30] sm:$0xf0] %v966
    %1015 = vst [vmem:[#allocation2 + $0x38] sm:$0xf0] %v968
    %v1018 = vrot.slane %v992, 4
    %v1019 = vrot.slane %v993, 4
    %1022 = vst [vmem:[#allocation2 + $0x50] sm:$0xf] %v1018
    %1023 = vst [vmem:[#allocation2 + $0x58] sm:$0xf] %v1019
    %v1024 = vld [vmem:[%s2] sm:$0xff]
    %v1025 = vld [vmem:[%s2 + $0x8] sm:$0xff]
    %v1026 = vld [vmem:[%s2 + $0x10] sm:$0xff]
    %v1027 = vld [vmem:[%s2 + $0x18] sm:$0xff]
    %v1028 = vld [vmem:[#allocation2] sm:$0xff]
    %v1029 = vld [vmem:[#allocation2 + $0x8] sm:$0xff]
    %v1030 = vld [vmem:[#allocation2 + $0x10] sm:$0xff]
    %v1031 = vld [vmem:[#allocation2 + $0x18] sm:$0xff]
    %v1032 = vld [vmem:[#allocation2 + $0x20] sm:$0xff]
    %v1033 = vld [vmem:[#allocation2 + $0x28] sm:$0xff]
    %v1034 = vld [vmem:[#allocation2 + $0x30] sm:$0xff]
    %v1035 = vld [vmem:[#allocation2 + $0x38] sm:$0xff]
    %v1036 = vld [vmem:[#allocation2 + $0x40] sm:$0xf]
    %v1037 = vld [vmem:[#allocation2 + $0x48] sm:$0xf]
    %v1038 = vld [vmem:[#allocation2 + $0x50] sm:$0xf]
    %v1039 = vld [vmem:[#allocation2 + $0x58] sm:$0xf]
    %v1040 = vld [vmem:[%s3] sm:$0xff]
    %v1041 = vld [vmem:[%s3 + $0x8] sm:$0xff]
    %v1042 = vld [vmem:[%s3 + $0x10] sm:$0xff]
    %v1043 = vld [vmem:[%s3 + $0x18] sm:$0xff]
    %1045 = vset.pattern.permute.xlu0 0
    %1046 = vperm.xlu0 %1045, %v1040
    %v1047 = vpop.permute.xlu0 %1046
    %1050 = vset.pattern.permute.xlu0 0
    %1051 = vperm.xlu0 %1050, %v1041
    %v1052 = vpop.permute.xlu0 %1051
    %1055 = vset.pattern.permute.xlu0 0
    %1056 = vperm.xlu0 %1055, %v1042
    %v1057 = vpop.permute.xlu0 %1056
    %1060 = vset.pattern.permute.xlu0 0
    %1061 = vperm.xlu0 %1060, %v1043
    %v1062 = vpop.permute.xlu0 %1061
    %vm1064 = vcmask 162816
    %v1066 = vsel %vm1064, %v1024, 0
    %v1069 = vsel %vm1064, %v1025, 0
    %v1072 = vsel %vm1064, %v1026, 0
    %v1075 = vsel %vm1064, %v1027, 0
    %vm1077 = vcmask 1043456
    %v1079 = vsel %vm1077, %v1036, 0
    %v1082 = vsel %vm1077, %v1037, 0
    %v1085 = vsel %vm1077, %v1038, 0
    %v1088 = vsel %vm1077, %v1039, 0
    %1090 = vmatprep.subr.mxu0 0.0
    %1091 = vmatpush1.msra.mxu0 0.0
    %1092 = vmatprep.subr.mxu0 0.0
    %1093 = vmatpush1.msra.mxu0 0.0
    %1094 = vmatprep.subr.mxu0 0.0
    %1095 = vmatpush1.msra.mxu0 0.0
    %1096 = vmatprep.subr.mxu0 0.0
    %1097 = vmatpush1.msra.mxu0 0.0
    %1098 = vmatprep.subr.mxu0 0.0
    %1099 = vmatpush1.msra.mxu0 0.0
    %1100 = vmatprep.subr.mxu0 0.0
    %1101 = vmatpush1.msra.mxu0 0.0
    %1102 = vmatprep.subr.mxu0 0.0
    %1103 = vmatpush1.msra.mxu0 0.0
    %1104 = vmatprep.subr.mxu0 0.0
    %1105 = vmatpush1.msra.mxu0 0.0
    %1106 = vmatprep.subr.mxu0 0.0
    %1107 = vmatpush1.msra.mxu0 0.0
    %1108 = vmatprep.subr.mxu0 0.0
    %1109 = vmatpush1.msra.mxu0 0.0
    %1110 = vmatprep.subr.mxu0 0.0
    %1111 = vmatpush1.msra.mxu0 0.0
    %1112 = vmatprep.subr.mxu0 0.0
    %1113 = vmatpush1.msra.mxu0 0.0
    %1114 = vmatprep.subr.mxu0 0.0
    %1115 = vmatpush1.msra.mxu0 0.0
    %1116 = vmatprep.subr.mxu0 %v1082
    %1117 = vmatpush1.msra.mxu0 %v1079
    %1118 = vmatprep.subr.mxu0 %v1033
    %1119 = vmatpush1.msra.mxu0 %v1032
    %1120 = vmatprep.subr.mxu0 %v1029
    %1121 = vmatpush1.msra.mxu0 %v1028
    %1122 = vmatprep.subr.mxu0 0.0
    %1123 = vmatpush2.msra.mxu0 0.0
    %1124 = vmatprep.subr.mxu0 0.0
    %1125 = vmatpush2.msra.mxu0 0.0
    %1126 = vmatprep.subr.mxu0 0.0
    %1127 = vmatpush2.msra.mxu0 0.0
    %1128 = vmatprep.subr.mxu0 0.0
    %1129 = vmatpush2.msra.mxu0 0.0
    %1130 = vmatprep.subr.mxu0 0.0
    %1131 = vmatpush2.msra.mxu0 0.0
    %1132 = vmatprep.subr.mxu0 0.0
    %1133 = vmatpush2.msra.mxu0 0.0
    %1134 = vmatprep.subr.mxu0 0.0
    %1135 = vmatpush2.msra.mxu0 0.0
    %1136 = vmatprep.subr.mxu0 0.0
    %1137 = vmatpush2.msra.mxu0 0.0
    %1138 = vmatprep.subr.mxu0 0.0
    %1139 = vmatpush2.msra.mxu0 0.0
    %1140 = vmatprep.subr.mxu0 0.0
    %1141 = vmatpush2.msra.mxu0 0.0
    %1142 = vmatprep.subr.mxu0 0.0
    %1143 = vmatpush2.msra.mxu0 0.0
    %1144 = vmatprep.subr.mxu0 0.0
    %1145 = vmatpush2.msra.mxu0 0.0
    %1146 = vmatprep.subr.mxu0 0.0
    %1147 = vmatpush2.msra.mxu0 0.0
    %1148 = vmatprep.subr.mxu0 0.0
    %1149 = vmatpush2.msra.mxu0 0.0
    %1150 = vmatprep.subr.mxu0 0.0
    %1151 = vmatpush2.msra.mxu0 0.0
    %1152 = vmatprep.subr.mxu0 0.0
    %1153 = vmatpush2.msra.mxu0 0.0
    %1154 = vmatprep.mubr.f32.mxu0 0.0
    %1155 = vmatmul.mubr.f32.gmra.mxu0 %v1066
    %v1156 = vpop.f32.mrf.mxu0
    %v1157 = vadd.f32 %v1047, %v1156
    %v1158 = vpop.f32.mrf.mxu0
    %v1159 = vadd.f32 %v1047, %v1158
    %1160 = vmatprep.mubr.f32.mxu0 0.0
    %1161 = vmatmul.mubr.f32.gmra.mxu0 %v1069
    %v1162 = vpop.f32.mrf.mxu0
    %v1163 = vadd.f32 %v1052, %v1162
    %v1164 = vpop.f32.mrf.mxu0
    %v1165 = vadd.f32 %v1052, %v1164
    %1166 = vmatprep.mubr.f32.mxu0 0.0
    %1167 = vmatmul.mubr.f32.gmra.mxu0 %v1072
    %v1168 = vpop.f32.mrf.mxu0
    %v1169 = vadd.f32 %v1057, %v1168
    %v1170 = vpop.f32.mrf.mxu0
    %v1171 = vadd.f32 %v1057, %v1170
    %1172 = vmatprep.mubr.f32.mxu0 0.0
    %1173 = vmatmul.mubr.f32.gmra.mxu0 %v1075
    %v1174 = vpop.f32.mrf.mxu0
    %v1175 = vadd.f32 %v1062, %v1174
    %v1176 = vpop.f32.mrf.mxu0
    %v1177 = vadd.f32 %v1062, %v1176
    %1178 = vdwg.mxu0
    %1179 = vmatprep.subr.mxu0 0.0
    %1180 = vmatpush1.msra.mxu0 0.0
    %1181 = vmatprep.subr.mxu0 0.0
    %1182 = vmatpush1.msra.mxu0 0.0
    %1183 = vmatprep.subr.mxu0 0.0
    %1184 = vmatpush1.msra.mxu0 0.0
    %1185 = vmatprep.subr.mxu0 0.0
    %1186 = vmatpush1.msra.mxu0 0.0
    %1187 = vmatprep.subr.mxu0 0.0
    %1188 = vmatpush1.msra.mxu0 0.0
    %1189 = vmatprep.subr.mxu0 0.0
    %1190 = vmatpush1.msra.mxu0 0.0
    %1191 = vmatprep.subr.mxu0 0.0
    %1192 = vmatpush1.msra.mxu0 0.0
    %1193 = vmatprep.subr.mxu0 0.0
    %1194 = vmatpush1.msra.mxu0 0.0
    %1195 = vmatprep.subr.mxu0 0.0
    %1196 = vmatpush1.msra.mxu0 0.0
    %1197 = vmatprep.subr.mxu0 0.0
    %1198 = vmatpush1.msra.mxu0 0.0
    %1199 = vmatprep.subr.mxu0 0.0
    %1200 = vmatpush1.msra.mxu0 0.0
    %1201 = vmatprep.subr.mxu0 0.0
    %1202 = vmatpush1.msra.mxu0 0.0
    %1203 = vmatprep.subr.mxu0 0.0
    %1204 = vmatpush1.msra.mxu0 0.0
    %1205 = vmatprep.subr.mxu0 %v1088
    %1206 = vmatpush1.msra.mxu0 %v1085
    %1207 = vmatprep.subr.mxu0 %v1035
    %1208 = vmatpush1.msra.mxu0 %v1034
    %1209 = vmatprep.subr.mxu0 %v1031
    %1210 = vmatpush1.msra.mxu0 %v1030
    %1211 = vmatprep.subr.mxu0 0.0
    %1212 = vmatpush2.msra.mxu0 0.0
    %1213 = vmatprep.subr.mxu0 0.0
    %1214 = vmatpush2.msra.mxu0 0.0
    %1215 = vmatprep.subr.mxu0 0.0
    %1216 = vmatpush2.msra.mxu0 0.0
    %1217 = vmatprep.subr.mxu0 0.0
    %1218 = vmatpush2.msra.mxu0 0.0
    %1219 = vmatprep.subr.mxu0 0.0
    %1220 = vmatpush2.msra.mxu0 0.0
    %1221 = vmatprep.subr.mxu0 0.0
    %1222 = vmatpush2.msra.mxu0 0.0
    %1223 = vmatprep.subr.mxu0 0.0
    %1224 = vmatpush2.msra.mxu0 0.0
    %1225 = vmatprep.subr.mxu0 0.0
    %1226 = vmatpush2.msra.mxu0 0.0
    %1227 = vmatprep.subr.mxu0 0.0
    %1228 = vmatpush2.msra.mxu0 0.0
    %1229 = vmatprep.subr.mxu0 0.0
    %1230 = vmatpush2.msra.mxu0 0.0
    %1231 = vmatprep.subr.mxu0 0.0
    %1232 = vmatpush2.msra.mxu0 0.0
    %1233 = vmatprep.subr.mxu0 0.0
    %1234 = vmatpush2.msra.mxu0 0.0
    %1235 = vmatprep.subr.mxu0 0.0
    %1236 = vmatpush2.msra.mxu0 0.0
    %1237 = vmatprep.subr.mxu0 0.0
    %1238 = vmatpush2.msra.mxu0 0.0
    %1239 = vmatprep.subr.mxu0 0.0
    %1240 = vmatpush2.msra.mxu0 0.0
    %1241 = vmatprep.subr.mxu0 0.0
    %1242 = vmatpush2.msra.mxu0 0.0
    %1243 = vmatprep.mubr.f32.mxu0 0.0
    %1244 = vmatmul.mubr.f32.gmra.mxu0 %v1066
    %v1245 = vpop.f32.mrf.mxu0
    %v1246 = vadd.f32 %v1047, %v1245
    %v1247 = vpop.f32.mrf.mxu0
    %v1248 = vadd.f32 %v1047, %v1247
    %1249 = vmatprep.mubr.f32.mxu0 0.0
    %1250 = vmatmul.mubr.f32.gmra.mxu0 %v1069
    %v1251 = vpop.f32.mrf.mxu0
    %v1252 = vadd.f32 %v1052, %v1251
    %v1253 = vpop.f32.mrf.mxu0
    %v1254 = vadd.f32 %v1052, %v1253
    %1255 = vmatprep.mubr.f32.mxu0 0.0
    %1256 = vmatmul.mubr.f32.gmra.mxu0 %v1072
    %v1257 = vpop.f32.mrf.mxu0
    %v1258 = vadd.f32 %v1057, %v1257
    %v1259 = vpop.f32.mrf.mxu0
    %v1260 = vadd.f32 %v1057, %v1259
    %1261 = vmatprep.mubr.f32.mxu0 0.0
    %1262 = vmatmul.mubr.f32.gmra.mxu0 %v1075
    %v1263 = vpop.f32.mrf.mxu0
    %v1264 = vadd.f32 %v1062, %v1263
    %v1265 = vpop.f32.mrf.mxu0
    %v1266 = vadd.f32 %v1062, %v1265
    %1267 = vdwg.mxu0
    %v1268 = vmax.f32 %v1157, 0.0
    %v1269 = vmax.f32 %v1159, 0.0
    %v1270 = vmax.f32 %v1246, 0.0
    %v1271 = vmax.f32 %v1248, 0.0
    %v1272 = vmax.f32 %v1163, 0.0
    %v1273 = vmax.f32 %v1165, 0.0
    %v1274 = vmax.f32 %v1252, 0.0
    %v1275 = vmax.f32 %v1254, 0.0
    %v1276 = vmax.f32 %v1169, 0.0
    %v1277 = vmax.f32 %v1171, 0.0
    %v1278 = vmax.f32 %v1258, 0.0
    %v1279 = vmax.f32 %v1260, 0.0
    %v1280 = vmax.f32 %v1175, 0.0
    %v1281 = vmax.f32 %v1177, 0.0
    %v1282 = vmax.f32 %v1264, 0.0
    %v1283 = vmax.f32 %v1266, 0.0
    %1284 = vst [vmem:[#allocation6] sm:$0xff] %v1268
    %1285 = vst [vmem:[#allocation6 + $0x8] sm:$0xff] %v1269
    %1286 = vst [vmem:[#allocation6 + $0x10] sm:$0xff] %v1270
    %1287 = vst [vmem:[#allocation6 + $0x18] sm:$0xff] %v1271
    %1288 = vst [vmem:[#allocation6 + $0x20] sm:$0xff] %v1272
    %1289 = vst [vmem:[#allocation6 + $0x28] sm:$0xff] %v1273
    %1290 = vst [vmem:[#allocation6 + $0x30] sm:$0xff] %v1274
    %1291 = vst [vmem:[#allocation6 + $0x38] sm:$0xff] %v1275
    %1292 = vst [vmem:[#allocation6 + $0x40] sm:$0xff] %v1276
    %1293 = vst [vmem:[#allocation6 + $0x48] sm:$0xff] %v1277
    %1294 = vst [vmem:[#allocation6 + $0x50] sm:$0xff] %v1278
    %1295 = vst [vmem:[#allocation6 + $0x58] sm:$0xff] %v1279
    %1296 = vst [vmem:[#allocation6 + $0x60] sm:$0xff] %v1280
    %1297 = vst [vmem:[#allocation6 + $0x68] sm:$0xff] %v1281
    %1298 = vst [vmem:[#allocation6 + $0x70] sm:$0xff] %v1282
    %1299 = vst [vmem:[#allocation6 + $0x78] sm:$0xff] %v1283
    // Predicated region
    $region22: #{tpu_custom_call.1} parent=1 // pred_check
      _
    $region23: #{tpu_custom_call.1} parent=1 // pred_check_branch
      %1301 = sbr.rel (0) target = $region25
    $region24: #{tpu_custom_call.1} parent=1 // pred_region
      %s1303 = ssub.s32 2048, 2048
      %1304 = vsyncadd [#allocation5], %s1303
      %s1305 = sshll.u32 [#allocation6], 4
      %s1306 = int_to_ptr.vmem [resolvable:$true] %s1305
      %1311 = dma.vmem_to_hbm [thread:$0]  %s1306, 2048, %s4, [#allocation5], 512, 512, 32
    $region25: #{tpu_custom_call.1} parent=1 // pred_fallthru
      _
    // Predicated region
    $region26: #{tpu_custom_call.1} parent=1 // pred_check
      _
    $region27: #{tpu_custom_call.1} parent=1 // pred_check_branch
      %1313 = sbr.rel (0) target = $region29
    $region28: #{tpu_custom_call.1} parent=1 // pred_region
      %1314 = dma.done [#allocation5], 2048
    $region29: #{tpu_custom_call.1} parent=1 // pred_fallthru
      _
    %1315 = vsyncpa [#allocation4], 1
    %1316 = vsyncpa [#allocation5], 1

</llo_original>
